<compile_context>
chip_gen: v5e
topology: v5e:2x2
jax: 0.10.0
libtpu: 0.0.40
codegen_flags: <defaults>
</compile_context>

<pallas_src>
import math

import jax
import jax.numpy as jnp
from jax import lax
from jax.experimental import pallas as pl
from jax.experimental.pallas import tpu as pltpu


_INV_SQRT2 = 1.0 / math.sqrt(2.0)


def _gelu_exact(x):
    # PyTorch nn.GELU() default is the exact (erf-based) GELU.
    return 0.5 * x * (1.0 + lax.erf(x * _INV_SQRT2))


def _readout_kernel(feat_ref, w1t_ref, v_ref, out_ref):
    # feat_ref : (1, TN, C)  feature-token tile (last grid step may be OOB-padded)
    # w1t_ref  : (C, C)      pre-transposed feature weight, (in, out) layout
    # v_ref    : (1, 1, C)   per-batch precomputed cls @ W2^T + bias (f32)
    # out_ref  : (1, TN, C)
    feat = feat_ref[0]                                              # (TN, C)
    h = jnp.dot(feat, w1t_ref[...], preferred_element_type=jnp.float32)
    h = h + v_ref[0].astype(jnp.float32)                            # (1, C) broadcast
    out_ref[0] = _gelu_exact(h).astype(out_ref.dtype)


def _round_up(x, m):
    return (x + m - 1) // m * m


def _vmem_budget_bytes():
    # Chip-aware working-set budget.  v7x has only 64 MiB physical VMEM; v5e/v6e
    # have 128 MiB.  Leave plenty of headroom for the compiler's own buffers.
    try:
        cap = pltpu.get_tpu_info().vmem_capacity_bytes
    except Exception:
        cap = 64 << 20                                  # assume smallest (v7x)
    return int(min(cap // 3, 40 << 20))


def _pick_tn(n, c, in_itemsize, out_itemsize, w_itemsize, budget):
    """Largest multiple-of-8 token tile (<= 512) whose double-buffered in/out tiles
    plus the resident (double-buffered) weight and cls row fit in `budget`."""
    fixed = 2 * c * c * w_itemsize + 2 * c * 4          # weight + cls_proj (f32)
    per_row = 2 * c * (in_itemsize + out_itemsize)      # dbl-buffered in + out row
    max_rows = (budget - fixed) // per_row
    cap = int(max(8, min(512, (max_rows // 8) * 8)))
    if n <= cap:
        return n                                        # full extent: always legal
    return cap                                          # partial last block is fine


def read_out(tokens, weight=None, bias=None, *, use_clstoken=False, tn=None,
             compute_dtype=None):
    """Pallas implementation of READ_OUT.forward.

    tokens : [B, N+1, C]
    weight : [C, 2C]  (PyTorch nn.Linear layout), required if use_clstoken
    bias   : [C]
    returns: [B, N, C]
    """
    B, Np1, C = tokens.shape
    N = Np1 - 1

    # Aligned feature slab.  With allow_input_fusion on this operand, XLA may fuse
    # the offset-1 slice straight into the pallas_call operand (no extra HBM copy).
    feature = lax.slice_in_dim(tokens, 1, Np1, axis=1)              # [B, N, C]

    if not use_clstoken:
        # Pure view/slice; let XLA fuse it into the consumer.
        return feature

    assert weight is not None and bias is not None
    assert weight.shape == (C, 2 * C)

    if compute_dtype is None:
        # Set to jnp.bfloat16 on v5e/v6e when model precision allows (accumulation
        # stays f32 inside the kernel).
        compute_dtype = tokens.dtype

    # PyTorch layout (out, in): first C input columns act on the feature tokens,
    # last C act on the cls token.  Transpose W1 ONCE in XLA so the kernel does a
    # plain row-major contraction.
    w1t = jnp.transpose(lax.slice(weight, (0, 0), (C, C)))          # (C_in, C_out)
    w2 = lax.slice(weight, (0, C), (C, 2 * C))                      # (C_out, C_in)

    # Hoist the degenerate cls projection + bias out of the hot kernel:
    #   v[b] = cls[b] @ W2^T + bias      -> [B, 1, C]  (f32)
    cls_token = tokens[:, 0, :]
    cls_proj = lax.dot_general(
        cls_token, w2,
        dimension_numbers=(((1,), (1,)), ((), ())),
        preferred_element_type=jnp.float32)
    cls_proj = (cls_proj + bias.astype(jnp.float32)).reshape(B, 1, C)

    feature_c = feature.astype(compute_dtype)
    w1t = w1t.astype(compute_dtype)

    in_b = jnp.dtype(compute_dtype).itemsize
    out_b = jnp.dtype(tokens.dtype).itemsize
    budget = _vmem_budget_bytes()

    if tn is None:
        tn = _pick_tn(N, C, in_b, out_b, in_b, budget)
        # v7x megacore: guarantee >= 2 grid steps when B == 1 so both TCs get work.
        if B == 1 and N > 8:
            tn = min(tn, max(8, _round_up(-(-N // 2), 8)))

    grid = (B, pl.cdiv(N, tn))

    # Explicit VMEM limit with headroom: never below the 32 MiB common default,
    # never above v7x's 64 MiB physical.
    needed = 2 * tn * C * (in_b + out_b) + 2 * C * C * in_b + 2 * C * 4
    vmem_limit = int(min(64 << 20, max(32 << 20, int(1.5 * needed) + (2 << 20))))

    cost = pl.CostEstimate(
        flops=2 * B * N * C * C,
        transcendentals=B * N * C,
        bytes_accessed=B * N * C * (in_b + out_b) + C * C * in_b + B * C * 4,
    )

    return pl.pallas_call(
        _readout_kernel,
        out_shape=jax.ShapeDtypeStruct((B, N, C), tokens.dtype),
        grid=grid,
        in_specs=[
            pl.BlockSpec((1, tn, C), lambda b, n: (b, n, 0)),   # feature tile
            pl.BlockSpec((C, C), lambda b, n: (0, 0)),          # W1^T (resident)
            pl.BlockSpec((1, 1, C), lambda b, n: (b, 0, 0)),    # cls_proj row
        ],
        out_specs=pl.BlockSpec((1, tn, C), lambda b, n: (b, n, 0)),
        compiler_params=pltpu.CompilerParams(
            dimension_semantics=("parallel", "parallel"),
            allow_input_fusion=[True, False, False],
            vmem_limit_bytes=vmem_limit,
        ),
        cost_estimate=cost,
    )(feature_c, w1t, cls_proj)


def _reference(tokens, weight, bias, use_clstoken):
    cls_token = tokens[:, 0]
    feature_token = tokens[:, 1:]
    if not use_clstoken:
        return feature_token
    cls_b = jnp.broadcast_to(cls_token[:, None, :], feature_token.shape)
    cat = jnp.concatenate([feature_token, cls_b], axis=-1)
    y = cat @ weight.T + bias
    return _gelu_exact(y)


if __name__ == "__main__":
    key = jax.random.PRNGKey(0)
    B, N, C = 2, 24, 128                  # tokens: [B, N+1, C]
    k_tok, k_w, k_b = jax.random.split(key, 3)

    tokens = jax.random.normal(k_tok, (B, N + 1, C), dtype=jnp.float32)
    # Deterministic Linear(2C -> C) params (PyTorch layout: weight [C, 2C], bias [C]).
    weight = jax.random.normal(k_w, (C, 2 * C), dtype=jnp.float32) * (1.0 / math.sqrt(2 * C))
    bias = jax.random.normal(k_b, (C,), dtype=jnp.float32) * 0.01

    ref_cls = _reference(tokens, weight, bias, True)

    # 1) use_clstoken=True, default tile picker (single full-extent token tile).
    out_cls = jax.block_until_ready(read_out(tokens, weight, bias, use_clstoken=True))
    assert out_cls.shape == (B, N, C)
    assert jnp.allclose(out_cls, ref_cls, atol=1e-4, rtol=1e-4)

    # 2) Partial last block: tn=16 over N=24 -> grid (B, 2) with a 8-row remainder.
    out_part = jax.block_until_ready(
        read_out(tokens, weight, bias, use_clstoken=True, tn=16))
    assert jnp.allclose(out_part, ref_cls, atol=1e-4, rtol=1e-4)

    # 3) B == 1: token axis auto-split into >= 2 tiles (v7x megacore path).
    out_b1 = jax.block_until_ready(
        read_out(tokens[:1], weight, bias, use_clstoken=True))
    assert jnp.allclose(out_b1, ref_cls[:1], atol=1e-4, rtol=1e-4)

    # 4) use_clstoken=False path: plain aligned slice (no Pallas kernel needed).
    out_plain = jax.block_until_ready(read_out(tokens, use_clstoken=False))
    assert jnp.allclose(out_plain, tokens[:, 1:, :])

    print("KERNEL_OK")
</pallas_src>

<mosaic_0001>
module attributes {stable_mosaic.version = 11 : i64} {
  func.func @_readout_kernel(%arg0: i32, %arg1: i32, %arg2: memref<1x24x128xf32, #tpu.memory_space<vmem>>, %arg3: memref<128x128xf32, #tpu.memory_space<vmem>>, %arg4: memref<1x1x128xf32, #tpu.memory_space<vmem>>, %arg5: memref<1x24x128xf32, #tpu.memory_space<vmem>>) attributes {dimension_semantics = [#tpu.dimension_semantics<parallel>, #tpu.dimension_semantics<parallel>], iteration_bounds = array<i64: 2, 1>, scalar_prefetch = 0 : i64, scratch_operands = 0 : i64, tpu.core_type = #tpu.core_type<tc>, window_params = [{transform_indices = @transform_0, window_bounds = array<i64: 1, 24, 128>}, {pipeline_mode = #tpu.pipeline_mode<synchronous>, transform_indices = @transform_1, window_bounds = array<i64: 128, 128>}, {transform_indices = @transform_2, window_bounds = array<i64: 1, 1, 128>}, {transform_indices = @transform_3, window_bounds = array<i64: 1, 24, 128>}]} {
    %c0 = arith.constant 0 : index
    %c0_0 = arith.constant 0 : index
    %c0_1 = arith.constant 0 : index
    %0 = vector.load %arg2[%c0, %c0_0, %c0_1] : memref<1x24x128xf32, #tpu.memory_space<vmem>>, vector<1x24x128xf32>
    %1 = vector.shape_cast %0 : vector<1x24x128xf32> to vector<24x128xf32>
    %c0_2 = arith.constant 0 : index
    %c0_3 = arith.constant 0 : index
    %2 = vector.load %arg3[%c0_2, %c0_3] : memref<128x128xf32, #tpu.memory_space<vmem>>, vector<128x128xf32>
    %cst = arith.constant dense<0.000000e+00> : vector<24x128xf32>
    %3 = tpu.matmul %1, %2, %cst {dimension_numbers = #tpu.dot_dimension_numbers<[1], [0], [0], [1], [0, 0, 1, 1], [], []>} : vector<24x128xf32>, vector<128x128xf32>, vector<24x128xf32> -> vector<24x128xf32>
    %c0_4 = arith.constant 0 : index
    %c0_5 = arith.constant 0 : index
    %c0_6 = arith.constant 0 : index
    %4 = vector.load %arg4[%c0_4, %c0_5, %c0_6] : memref<1x1x128xf32, #tpu.memory_space<vmem>>, vector<1x1x128xf32>
    %5 = vector.shape_cast %4 : vector<1x1x128xf32> to vector<1x128xf32>
    %6 = vector.broadcast %5 : vector<1x128xf32> to vector<24x128xf32>
    %7 = arith.addf %3, %6 : vector<24x128xf32>
    %cst_7 = arith.constant 5.000000e-01 : f32
    %8 = vector.broadcast %cst_7 : f32 to vector<24x128xf32>
    %9 = arith.mulf %8, %7 : vector<24x128xf32>
    %cst_8 = arith.constant 0.707106769 : f32
    %10 = vector.broadcast %cst_8 : f32 to vector<24x128xf32>
    %11 = arith.mulf %7, %10 : vector<24x128xf32>
    %12 = math.erf %11 : vector<24x128xf32>
    %cst_9 = arith.constant 1.000000e+00 : f32
    %13 = vector.broadcast %cst_9 : f32 to vector<24x128xf32>
    %14 = arith.addf %13, %12 : vector<24x128xf32>
    %15 = arith.mulf %9, %14 : vector<24x128xf32>
    %c0_10 = arith.constant 0 : index
    %c0_11 = arith.constant 0 : index
    %c0_12 = arith.constant 0 : index
    %16 = vector.load %arg5[%c0_10, %c0_11, %c0_12] : memref<1x24x128xf32, #tpu.memory_space<vmem>>, vector<1x24x128xf32>
    %17 = vector.shape_cast %16 : vector<1x24x128xf32> to vector<24x128xf32>
    %18 = vector.shape_cast %15 : vector<24x128xf32> to vector<1x24x128xf32>
    tpu.vector_store %arg5[%c0_10, %c0_11, %c0_12], %18 {strides = array<i32>} : memref<1x24x128xf32, #tpu.memory_space<vmem>>, vector<1x24x128xf32>,
    return
  }
  func.func @transform_0(%arg0: i32, %arg1: i32) -> (i32, i32, i32) {
    %c0_i32 = arith.constant 0 : i32
    %c0_i32_0 = arith.constant 0 : i32
    return %arg0, %arg1, %c0_i32 : i32, i32, i32
  }
  func.func @transform_1(%arg0: i32, %arg1: i32) -> (i32, i32) {
    %c0_i32 = arith.constant 0 : i32
    %c0_i32_0 = arith.constant 0 : i32
    %c0_i32_1 = arith.constant 0 : i32
    return %c0_i32, %c0_i32_0 : i32, i32
  }
  func.func @transform_2(%arg0: i32, %arg1: i32) -> (i32, i32, i32) {
    %c0_i32 = arith.constant 0 : i32
    %c0_i32_0 = arith.constant 0 : i32
    %c0_i32_1 = arith.constant 0 : i32
    return %arg0, %c0_i32, %c0_i32_0 : i32, i32, i32
  }
  func.func @transform_3(%arg0: i32, %arg1: i32) -> (i32, i32, i32) {
    %c0_i32 = arith.constant 0 : i32
    %c0_i32_0 = arith.constant 0 : i32
    return %arg0, %arg1, %c0_i32 : i32, i32, i32
  }
}

</mosaic_0001>

<llo_original>
// kernel: tpu_custom_call.1
$region0: #{tpu_custom_call.1}
  #allocation0 [shape = 'u32[]', space=smem, size = 0x4, offset = 0x4, fixed_abs, tag = 'smem constant byte address 0x4 - core index']
  #allocation1 [shape = 'u32[72,128]{1,0:T(1,128)}', space=vmem, size = 0x9000, scoped, tag = 'internal scratch']
  %s0 = inlined_call_operand.hbm [shape: f32[2,24,128], index: 0, kind: input, shape index: {}]
  %s1 = inlined_call_operand.hbm [shape: f32[128,128], index: 1, kind: input, shape index: {}]
  %s2 = inlined_call_operand.hbm [shape: f32[2,1,128], index: 2, kind: input, shape index: {}]
  %s3 = inlined_call_operand.hbm [shape: f32[2,24,128], index: 3, kind: output, shape index: {}]
  %s4 = sld [smem:[#allocation0]]
  $region57: #{tpu_custom_call.1} parent=0
    _
  %s6 = ssub.s32 1, %s4
  %s7 = scalar_select 0, %s6, %s4
  $region1: #{tpu_custom_call.1} parent=0
    #allocation2 [shape = 'u8[24576]{0}', space=vmem, size = 0x6000, scoped, tag = 'input window, operand 0']
    #allocation3 [shape = 's32[2]{0}', space=sflag, size = 0x8, scoped, tag = 'scoped memory for tpu_custom_call.1']
    #allocation4 [shape = 's32[2]{0}', space=sflag, size = 0x8, scoped, tag = 'scoped memory for tpu_custom_call.1']
    #allocation5 [shape = 'u8[65536]{0}', space=vmem, size = 0x10000, scoped, tag = 'input window, operand 1, single buffered']
    #allocation6 [shape = 's32[1]{0}', space=sflag, size = 0x4, scoped, tag = 'scoped memory for tpu_custom_call.1']
    #allocation7 [shape = 'u8[1024]{0}', space=vmem, size = 0x400, scoped, tag = 'input window, operand 2']
    #allocation8 [shape = 'u8[24576]{0}', space=vmem, size = 0x6000, scoped, tag = 'output window, operand 0']
    %8 = vsyncpa [#allocation3], 0
    %s9 = scalar_lea.sflag [#allocation3], 1
    %10 = vsyncpa %s9, 0
    %11 = vsyncpa [#allocation6], 0
    %12 = vsyncpa [#allocation4], 0
    %s13 = scalar_lea.sflag [#allocation4], 1
    %14 = vsyncpa %s13, 0
    loop: start=0, step=1, limit=4
    $region2: #{tpu_custom_call.1} parent=1 // loop_pre_header
      _
    $region3: #{tpu_custom_call.1} parent=1 // loop_header
      %s16 = sphi 0, %s20
      %p17 = scmp.ge.s32.totalorder %s16, 4
      %s23 = sphi 0, %s35
      %s24 = sphi 0, %s31
      %s25 = sphi 0, %s23
      %s26 = sphi 0, %s24
      %s27 = sphi 0, %s25
      %s28 = sphi 0, %s26
      %s40 = sphi 0, %s42
      %s43 = sphi 0, %s40
      %s44 = sphi 0, %s43
      %s60 = sphi 0, %s44
      %s64 = sphi 0, %s64
      %s66 = sphi 0, %s64
      %s67 = sphi 0, %s66
      %s81 = sphi 0, %s67
      %s87 = sphi 0, %s89
      %s90 = sphi 0, %s87
      %s91 = sphi 0, %s90
      %s107 = sphi 0, %s91
      %s115 = sphi 0, %s117
      %s118 = sphi 0, %s115
      %s119 = sphi 0, %s118
      %s135 = sphi 0, %s119
    $region4: #{tpu_custom_call.1} parent=1 // loop_header_branch
      %19 = sbr.rel (%p17) target = $region8
    $region5: #{tpu_custom_call.1} parent=1 // loop_body
      %s21 = ssub.s32 %s16, 1
      %s22 = ssub.s32 %s16, 2
      %s29 = sadd.s32 1, %s24
      %p30 = scmp.ge.s32.totalorder %s29, 1
      %s31 = scalar_select %p30, 0, %s29
      %s32 = sadd.s32 1, %s23
      %s33 = scalar_select %p30, %s32, %s23
      %p34 = scmp.ge.s32.totalorder %s33, 2
      %s35 = scalar_select %p34, 0, %s33
      %s36 = ssub.s32 %s23, %s35
      %s37 = ssub.s32 %s24, %s31
      %s38 = sor.u32 %s36, %s37
      %p39 = scmp.eq.s32.totalorder %s38, 0
      %s41 = sadd.s32 %s40, 1
      %s42 = scalar_select %p39, %s40, %s41
      %p45 = pneg %p39
      %p46 = scmp.eq.s32.totalorder %s16, 1
      %p47 = por %p45, %p46
      %p48 = scmp.ne.s32.totalorder %s40, %s43
      %p49 = scmp.eq.s32.totalorder %s16, 0
      %p50 = por %p48, %p49
      %p51 = scmp.ne.s32.totalorder %s40, %s43
      %p52 = scmp.eq.s32.totalorder %s21, 1
      %p53 = por %p51, %p52
      %p54 = scmp.ne.s32.totalorder %s43, %s44
      %p55 = scmp.eq.s32.totalorder %s21, 0
      %p56 = por %p54, %p55
      %p57 = scmp.ne.s32.totalorder %s43, %s44
      %p58 = scmp.eq.s32.totalorder %s22, 1
      %p59 = por %p57, %p58
      %p61 = scmp.ne.s32.totalorder %s44, %s60
      %p62 = scmp.eq.s32.totalorder %s22, 0
      %p63 = por %p61, %p62
      %s65 = sadd.s32 %s64, 1
      %p68 = scmp.eq.s32.totalorder %s16, 1
      %p69 = scmp.ne.s32.totalorder %s64, %s66
      %p70 = scmp.eq.s32.totalorder %s16, 0
      %p71 = por %p69, %p70
      %p72 = scmp.ne.s32.totalorder %s64, %s66
      %p73 = scmp.eq.s32.totalorder %s21, 1
      %p74 = por %p72, %p73
      %p75 = scmp.ne.s32.totalorder %s66, %s67
      %p76 = scmp.eq.s32.totalorder %s21, 0
      %p77 = por %p75, %p76
      %p78 = scmp.ne.s32.totalorder %s66, %s67
      %p79 = scmp.eq.s32.totalorder %s22, 1
      %p80 = por %p78, %p79
      %p82 = scmp.ne.s32.totalorder %s67, %s81
      %p83 = scmp.eq.s32.totalorder %s22, 0
      %p84 = por %p82, %p83
      %s85 = ssub.s32 %s23, %s35
      %p86 = scmp.eq.s32.totalorder %s85, 0
      %s88 = sadd.s32 %s87, 1
      %s89 = scalar_select %p86, %s87, %s88
      %p92 = pneg %p86
      %p93 = scmp.eq.s32.totalorder %s16, 1
      %p94 = por %p92, %p93
      %p95 = scmp.ne.s32.totalorder %s87, %s90
      %p96 = scmp.eq.s32.totalorder %s16, 0
      %p97 = por %p95, %p96
      %p98 = scmp.ne.s32.totalorder %s87, %s90
      %p99 = scmp.eq.s32.totalorder %s21, 1
      %p100 = por %p98, %p99
      %p101 = scmp.ne.s32.totalorder %s90, %s91
      %p102 = scmp.eq.s32.totalorder %s21, 0
      %p103 = por %p101, %p102
      %p104 = scmp.ne.s32.totalorder %s90, %s91
      %p105 = scmp.eq.s32.totalorder %s22, 1
      %p106 = por %p104, %p105
      %p108 = scmp.ne.s32.totalorder %s91, %s107
      %p109 = scmp.eq.s32.totalorder %s22, 0
      %p110 = por %p108, %p109
      %s111 = ssub.s32 %s23, %s35
      %s112 = ssub.s32 %s24, %s31
      %s113 = sor.u32 %s111, %s112
      %p114 = scmp.eq.s32.totalorder %s113, 0
      %s116 = sadd.s32 %s115, 1
      %s117 = scalar_select %p114, %s115, %s116
      %p120 = pneg %p114
      %p121 = scmp.eq.s32.totalorder %s16, 1
      %p122 = por %p120, %p121
      %p123 = scmp.ne.s32.totalorder %s115, %s118
      %p124 = scmp.eq.s32.totalorder %s16, 0
      %p125 = por %p123, %p124
      %p126 = scmp.ne.s32.totalorder %s115, %s118
      %p127 = scmp.eq.s32.totalorder %s21, 1
      %p128 = por %p126, %p127
      %p129 = scmp.ne.s32.totalorder %s118, %s119
      %p130 = scmp.eq.s32.totalorder %s21, 0
      %p131 = por %p129, %p130
      %p132 = scmp.ne.s32.totalorder %s118, %s119
      %p133 = scmp.eq.s32.totalorder %s22, 1
      %p134 = por %p132, %p133
      %p136 = scmp.ne.s32.totalorder %s119, %s135
      %p137 = scmp.eq.s32.totalorder %s22, 0
      %p138 = por %p136, %p137
      %p139 = scmp.le.s32.totalorder 1, %s16
      %p140 = scmp.lt.s32.totalorder %s16, 3
      %p141 = pnand %p139, %p140
      %p142 = pneg %p141
      // Predicated region
      $region9: #{tpu_custom_call.1} parent=5 // pred_check
        _
      $region10: #{tpu_custom_call.1} parent=5 // pred_check_branch
        %144 = sbr.rel (%p141) target = $region12
      $region11: #{tpu_custom_call.1} parent=5 // pred_region
        %s145 = ssub.s32 %s16, 1
        // Predicated region
        $region13: #{tpu_custom_call.1} parent=11 // pred_check
          %p146 = pneg %p77
        $region14: #{tpu_custom_call.1} parent=11 // pred_check_branch
          %148 = sbr.rel (%p146) target = $region16
        $region15: #{tpu_custom_call.1} parent=11 // pred_region
          %150 = vsyncadd [#allocation6], 0
          %s151 = sshll.u32 %s1, 4
          %s152 = int_to_ptr.hbm [resolvable:$true] %s151
          %s153 = sshll.u32 [#allocation5], 4
          %s154 = int_to_ptr.vmem [resolvable:$true] %s153
          %159 = dma.hbm_to_vmem [thread:$0]  %s152, 2048, %s154, [#allocation6], 128, 128, 8
        $region16: #{tpu_custom_call.1} parent=11 // pred_fallthru
          _
      $region12: #{tpu_custom_call.1} parent=5 // pred_fallthru
        _
      %p160 = scmp.lt.s32.totalorder %s16, 2
      // Predicated region
      $region17: #{tpu_custom_call.1} parent=5 // pred_check
        %p161 = pneg %p160
      $region18: #{tpu_custom_call.1} parent=5 // pred_check_branch
        %163 = sbr.rel (%p161) target = $region20
      $region19: #{tpu_custom_call.1} parent=5 // pred_region
        // Predicated region
        $region21: #{tpu_custom_call.1} parent=19 // pred_check
          %p164 = pneg %p50
        $region22: #{tpu_custom_call.1} parent=19 // pred_check_branch
          %166 = sbr.rel (%p164) target = $region24
        $region23: #{tpu_custom_call.1} parent=19 // pred_region
          %s167 = sand.u32 %s16, 1
          %s168 = scalar_lea.sflag [#allocation3], %s167
          %s169 = sand.u32 %s40, 1
          %s170 = smul.addr %s169, 24
          %s171 = scalar_lea.vmem [#allocation2], %s170
          %s172 = smul.u32 3, %s24
          %174 = vsyncadd %s168, 0
          %s175 = smul.addr %s23, 3
          %s176 = sadd.s32 %s172, %s175
          %s177 = smul.addr %s176, 8
          %s178 = scalar_lea.hbm %s0, %s177
          %s179 = sshll.u32 %s178, 4
          %s180 = int_to_ptr.hbm [resolvable:$true] %s179
          %s181 = sshll.u32 %s171, 4
          %s182 = int_to_ptr.vmem [resolvable:$true] %s181
          %187 = dma.hbm_to_vmem [thread:$0]  %s180, 384, %s182, %s168, 128, 128, 8
        $region24: #{tpu_custom_call.1} parent=19 // pred_fallthru
          _
        // Predicated region
        $region25: #{tpu_custom_call.1} parent=19 // pred_check
          %p188 = pneg %p97
        $region26: #{tpu_custom_call.1} parent=19 // pred_check_branch
          %190 = sbr.rel (%p188) target = $region28
        $region27: #{tpu_custom_call.1} parent=19 // pred_region
          %s191 = sand.u32 %s16, 1
          %s192 = scalar_lea.sflag [#allocation3], %s191
          %s193 = sand.u32 %s87, 1
          %s194 = scalar_lea.vmem [#allocation7], %s193
          %196 = vsyncadd %s192, 0
          %s197 = scalar_lea.hbm %s2, %s23
          %s199 = sshll.u32 %s197, 4
          %s200 = int_to_ptr.hbm [resolvable:$true] %s199
          %s201 = sshll.u32 %s194, 4
          %s202 = int_to_ptr.vmem [resolvable:$true] %s201
          %204 = dma.hbm_to_vmem [thread:$0]  %s200, 16, %s202, %s192
        $region28: #{tpu_custom_call.1} parent=19 // pred_fallthru
          _
      $region20: #{tpu_custom_call.1} parent=5 // pred_fallthru
        _
      %p205 = scmp.le.s32.totalorder 1, %s16
      %p206 = scmp.lt.s32.totalorder %s16, 3
      %p207 = pnand %p205, %p206
      %p208 = pneg %p207
      // Predicated region
      $region29: #{tpu_custom_call.1} parent=5 // pred_check
        _
      $region30: #{tpu_custom_call.1} parent=5 // pred_check_branch
        %210 = sbr.rel (%p207) target = $region32
      $region31: #{tpu_custom_call.1} parent=5 // pred_region
        %s211 = ssub.s32 %s16, 1
        %s212 = sand.u32 %s21, 1
        %s213 = scalar_lea.sflag [#allocation3], %s212
        %s214 = sand.u32 %s43, 1
        %s215 = smul.addr %s214, 24
        %s216 = scalar_lea.vmem [#allocation2], %s215
        // Predicated region
        $region33: #{tpu_custom_call.1} parent=31 // pred_check
          %p217 = pneg %p56
        $region34: #{tpu_custom_call.1} parent=31 // pred_check_branch
          %219 = sbr.rel (%p217) target = $region36
        $region35: #{tpu_custom_call.1} parent=31 // pred_region
          %221 = dma.done %s213, 384
        $region36: #{tpu_custom_call.1} parent=31 // pred_fallthru
          _
        // Predicated region
        $region37: #{tpu_custom_call.1} parent=31 // pred_check
          %p222 = pneg %p77
        $region38: #{tpu_custom_call.1} parent=31 // pred_check_branch
          %224 = sbr.rel (%p222) target = $region40
        $region39: #{tpu_custom_call.1} parent=31 // pred_region
          %226 = dma.done [#allocation6], 2048
        $region40: #{tpu_custom_call.1} parent=31 // pred_fallthru
          _
        %s227 = sand.u32 %s21, 1
        %s228 = scalar_lea.sflag [#allocation3], %s227
        %s229 = sand.u32 %s90, 1
        %s230 = scalar_lea.vmem [#allocation7], %s229
        // Predicated region
        $region41: #{tpu_custom_call.1} parent=31 // pred_check
          %p231 = pneg %p103
        $region42: #{tpu_custom_call.1} parent=31 // pred_check_branch
          %233 = sbr.rel (%p231) target = $region44
        $region43: #{tpu_custom_call.1} parent=31 // pred_region
          %235 = dma.done %s228, 16
        $region44: #{tpu_custom_call.1} parent=31 // pred_fallthru
          _
        %s236 = sand.u32 %s21, 1
        %s237 = scalar_lea.sflag [#allocation3], %s236
        %s238 = sand.u32 %s43, 1
        %s239 = smul.addr %s238, 24
        %s240 = scalar_lea.vmem [#allocation2], %s239
        %p241 = pneg %p56
        %p242 = pneg %p53
        %p243 = pneg %p77
        %p244 = pneg %p74
        %s245 = sand.u32 %s21, 1
        %s246 = scalar_lea.sflag [#allocation3], %s245
        %s247 = sand.u32 %s90, 1
        %s248 = scalar_lea.vmem [#allocation7], %s247
        %p249 = pneg %p103
        %p250 = pneg %p100
        %p251 = pneg %p131
        %p252 = pneg %p128
        %s253 = sand.u32 %s118, 1
        %s254 = scalar_lea.sflag [#allocation4], %s253
        %s255 = sand.u32 %s118, 1
        %s256 = smul.addr %s255, 24
        %s257 = scalar_lea.vmem [#allocation8], %s256
        %s258 = smul.u32 3, %s26
        %s259 = smul.u32 3, %s26
        %v260 = vld [vmem:[%s216] sm:$0xff]
        %v261 = vld [vmem:[%s216 + $0x8] sm:$0xff]
        %v262 = vld [vmem:[%s216 + $0x10] sm:$0xff]
        %v263 = vld [vmem:[#allocation5] sm:$0xff]
        %v264 = vld [vmem:[#allocation5 + $0x8] sm:$0xff]
        %v265 = vld [vmem:[#allocation5 + $0x10] sm:$0xff]
        %v266 = vld [vmem:[#allocation5 + $0x18] sm:$0xff]
        %v267 = vld [vmem:[#allocation5 + $0x20] sm:$0xff]
        %v268 = vld [vmem:[#allocation5 + $0x28] sm:$0xff]
        %v269 = vld [vmem:[#allocation5 + $0x30] sm:$0xff]
        %v270 = vld [vmem:[#allocation5 + $0x38] sm:$0xff]
        %v271 = vld [vmem:[#allocation5 + $0x40] sm:$0xff]
        %v272 = vld [vmem:[#allocation5 + $0x48] sm:$0xff]
        %v273 = vld [vmem:[#allocation5 + $0x50] sm:$0xff]
        %v274 = vld [vmem:[#allocation5 + $0x58] sm:$0xff]
        %v275 = vld [vmem:[#allocation5 + $0x60] sm:$0xff]
        %v276 = vld [vmem:[#allocation5 + $0x68] sm:$0xff]
        %v277 = vld [vmem:[#allocation5 + $0x70] sm:$0xff]
        %v278 = vld [vmem:[#allocation5 + $0x78] sm:$0xff]
        %v279 = vld [vmem:[%s230] sm:$0x1]
        %v281 = vperm.slane %v279, 0
        %283 = vmatpush.msra.mxu0 %v278
        %284 = vmatpush.msra.mxu0 %v277
        %285 = vmatpush.msra.mxu0 %v276
        %286 = vmatpush.msra.mxu0 %v275
        %287 = vmatpush.msra.mxu0 %v274
        %288 = vmatpush.msra.mxu0 %v273
        %289 = vmatpush.msra.mxu0 %v272
        %290 = vmatpush.msra.mxu0 %v271
        %291 = vmatpush.msra.mxu0 %v270
        %292 = vmatpush.msra.mxu0 %v269
        %293 = vmatpush.msra.mxu0 %v268
        %294 = vmatpush.msra.mxu0 %v267
        %295 = vmatpush.msra.mxu0 %v266
        %296 = vmatpush.msra.mxu0 %v265
        %297 = vmatpush.msra.mxu0 %v264
        %298 = vmatpush.msra.mxu0 %v263
        %299 = vmatmul.f32.gmra.mxu0 %v260
        %v300 = vpop.f32.mrf.mxu0
        %v301 = vadd.f32 %v281, %v300
        %302 = vmatmul.f32.gmra.mxu0 %v261
        %v303 = vpop.f32.mrf.mxu0
        %v304 = vadd.f32 %v281, %v303
        %305 = vmatmul.f32.gmra.mxu0 %v262
        %v306 = vpop.f32.mrf.mxu0
        %v307 = vadd.f32 %v281, %v306
        %308 = vdwg.mxu0
        %v309 = vmul.f32 %v301, 0.5
        %v310 = vmul.f32 %v304, 0.5
        %v311 = vmul.f32 %v307, 0.5
        %v312 = vmul.f32 %v301, 0.70710677
        %v313 = vmul.f32 %v304, 0.70710677
        %v314 = vmul.f32 %v307, 0.70710677
        %v315 = vmul.f32 %v312, %v312
        %v316 = vmin.f32 16.0, %v315
        %v317 = vmul.f32 %v316, 2.1237322e-06
        %v318 = vadd.f32 %v317, 0.00028619796
        %v319 = vmul.f32 %v316, %v318
        %v320 = vadd.f32 %v319, 0.0036580483
        %v321 = vmul.f32 %v316, %v320
        %v322 = vadd.f32 %v321, 0.05243302
        %v323 = vmul.f32 %v316, %v322
        %v324 = vadd.f32 %v323, 0.18741608
        %v325 = vmul.f32 %v316, %v324
        %v326 = vadd.f32 %v325, 1.1283791
        %v327 = vmul.f32 %v312, %v326
        %v328 = vmul.f32 %v316, 3.8918573e-05
        %v329 = vadd.f32 %v328, 0.001143296
        %v330 = vmul.f32 %v316, %v329
        %v331 = vadd.f32 %v330, 0.014752088
        %v332 = vmul.f32 %v316, %v331
        %v333 = vadd.f32 %v332, 0.112945676
        %v334 = vmul.f32 %v316, %v333
        %v335 = vadd.f32 %v334, 0.4994258
        %v336 = vmul.f32 %v316, %v335
        %v337 = vadd.f32 %v336, 1.0
        %v338 = vrcp.pop %v337
        %v339 = vmul.f32 %v337, %v338
        %v340 = vsub.f32 1.0, %v339
        %v341 = vmul.f32 %v338, %v340
        %v342 = vadd.f32 %v338, %v341
        %vm343 = vweird.f32 %v337
        %vm344 = vweird.f32 %v338
        %vm345 = vmor %vm343, %vm344
        %v346 = vsel %vm345, %v338, %v342
        %v347 = vand.u32 2147483647, %v337
        %vm348 = vcmp.eq.f32.partialorder %v347, 8.507059e+37
        %v349 = vand.u32 %v337, 2147483648
        %v350 = vor.u32 1.1754944e-38, %v349
        %v351 = vsel %vm348, %v350, %v346
        %v352 = vmul.f32 %v327, %v351
        %v353 = vmin.f32 %v352, 1.0
        %v354 = vmax.f32 %v353, -1.0
        %v355 = vmul.f32 %v313, %v313
        %v356 = vmin.f32 16.0, %v355
        %v357 = vmul.f32 %v356, 2.1237322e-06
        %v358 = vadd.f32 %v357, 0.00028619796
        %v359 = vmul.f32 %v356, %v358
        %v360 = vadd.f32 %v359, 0.0036580483
        %v361 = vmul.f32 %v356, %v360
        %v362 = vadd.f32 %v361, 0.05243302
        %v363 = vmul.f32 %v356, %v362
        %v364 = vadd.f32 %v363, 0.18741608
        %v365 = vmul.f32 %v356, %v364
        %v366 = vadd.f32 %v365, 1.1283791
        %v367 = vmul.f32 %v313, %v366
        %v368 = vmul.f32 %v356, 3.8918573e-05
        %v369 = vadd.f32 %v368, 0.001143296
        %v370 = vmul.f32 %v356, %v369
        %v371 = vadd.f32 %v370, 0.014752088
        %v372 = vmul.f32 %v356, %v371
        %v373 = vadd.f32 %v372, 0.112945676
        %v374 = vmul.f32 %v356, %v373
        %v375 = vadd.f32 %v374, 0.4994258
        %v376 = vmul.f32 %v356, %v375
        %v377 = vadd.f32 %v376, 1.0
        %v378 = vrcp.pop %v377
        %v379 = vmul.f32 %v377, %v378
        %v380 = vsub.f32 1.0, %v379
        %v381 = vmul.f32 %v378, %v380
        %v382 = vadd.f32 %v378, %v381
        %vm383 = vweird.f32 %v377
        %vm384 = vweird.f32 %v378
        %vm385 = vmor %vm383, %vm384
        %v386 = vsel %vm385, %v378, %v382
        %v387 = vand.u32 2147483647, %v377
        %vm388 = vcmp.eq.f32.partialorder %v387, 8.507059e+37
        %v389 = vand.u32 %v377, 2147483648
        %v390 = vor.u32 1.1754944e-38, %v389
        %v391 = vsel %vm388, %v390, %v386
        %v392 = vmul.f32 %v367, %v391
        %v393 = vmin.f32 %v392, 1.0
        %v394 = vmax.f32 %v393, -1.0
        %v395 = vmul.f32 %v314, %v314
        %v396 = vmin.f32 16.0, %v395
        %v397 = vmul.f32 %v396, 2.1237322e-06
        %v398 = vadd.f32 %v397, 0.00028619796
        %v399 = vmul.f32 %v396, %v398
        %v400 = vadd.f32 %v399, 0.0036580483
        %v401 = vmul.f32 %v396, %v400
        %v402 = vadd.f32 %v401, 0.05243302
        %v403 = vmul.f32 %v396, %v402
        %v404 = vadd.f32 %v403, 0.18741608
        %v405 = vmul.f32 %v396, %v404
        %v406 = vadd.f32 %v405, 1.1283791
        %v407 = vmul.f32 %v314, %v406
        %v408 = vmul.f32 %v396, 3.8918573e-05
        %v409 = vadd.f32 %v408, 0.001143296
        %v410 = vmul.f32 %v396, %v409
        %v411 = vadd.f32 %v410, 0.014752088
        %v412 = vmul.f32 %v396, %v411
        %v413 = vadd.f32 %v412, 0.112945676
        %v414 = vmul.f32 %v396, %v413
        %v415 = vadd.f32 %v414, 0.4994258
        %v416 = vmul.f32 %v396, %v415
        %v417 = vadd.f32 %v416, 1.0
        %v418 = vrcp.pop %v417
        %v419 = vmul.f32 %v417, %v418
        %v420 = vsub.f32 1.0, %v419
        %v421 = vmul.f32 %v418, %v420
        %v422 = vadd.f32 %v418, %v421
        %vm423 = vweird.f32 %v417
        %vm424 = vweird.f32 %v418
        %vm425 = vmor %vm423, %vm424
        %v426 = vsel %vm425, %v418, %v422
        %v427 = vand.u32 2147483647, %v417
        %vm428 = vcmp.eq.f32.partialorder %v427, 8.507059e+37
        %v429 = vand.u32 %v417, 2147483648
        %v430 = vor.u32 1.1754944e-38, %v429
        %v431 = vsel %vm428, %v430, %v426
        %v432 = vmul.f32 %v407, %v431
        %v433 = vmin.f32 %v432, 1.0
        %v434 = vmax.f32 %v433, -1.0
        %v435 = vadd.f32 %v354, 1.0
        %v436 = vadd.f32 %v394, 1.0
        %v437 = vadd.f32 %v434, 1.0
        %v438 = vmul.f32 %v309, %v435
        %v439 = vmul.f32 %v310, %v436
        %v440 = vmul.f32 %v311, %v437
        %441 = vst [vmem:[%s257] sm:$0xff] %v438
        %442 = vst [vmem:[%s257 + $0x8] sm:$0xff] %v439
        %443 = vst [vmem:[%s257 + $0x10] sm:$0xff] %v440
        %s444 = sand.u32 %s118, 1
        %s445 = scalar_lea.sflag [#allocation4], %s444
        %s446 = sand.u32 %s118, 1
        %s447 = smul.addr %s446, 24
        %s448 = scalar_lea.vmem [#allocation8], %s447
        // Predicated region
        $region45: #{tpu_custom_call.1} parent=31 // pred_check
          %p449 = pneg %p128
        $region46: #{tpu_custom_call.1} parent=31 // pred_check_branch
          %451 = sbr.rel (%p449) target = $region48
        $region47: #{tpu_custom_call.1} parent=31 // pred_region
          %s452 = smul.u32 3, %s26
          %454 = vsyncadd %s445, 0
          %s455 = smul.addr %s25, 3
          %s456 = sadd.s32 %s452, %s455
          %s457 = smul.addr %s456, 8
          %s458 = scalar_lea.hbm %s3, %s457
          %s459 = sshll.u32 %s448, 4
          %s460 = int_to_ptr.vmem [resolvable:$true] %s459
          %s461 = sshll.u32 %s458, 4
          %s462 = int_to_ptr.hbm [resolvable:$true] %s461
          %467 = dma.vmem_to_hbm [thread:$0]  %s460, 384, %s462, %s445, 128, 128, 8
        $region48: #{tpu_custom_call.1} parent=31 // pred_fallthru
          _
      $region32: #{tpu_custom_call.1} parent=5 // pred_fallthru
        _
      %p468 = scmp.le.s32.totalorder 2, %s16
      // Predicated region
      $region49: #{tpu_custom_call.1} parent=5 // pred_check
        %p469 = pneg %p468
      $region50: #{tpu_custom_call.1} parent=5 // pred_check_branch
        %471 = sbr.rel (%p469) target = $region52
      $region51: #{tpu_custom_call.1} parent=5 // pred_region
        %s472 = ssub.s32 %s16, 2
        // Predicated region
        $region53: #{tpu_custom_call.1} parent=51 // pred_check
          %p473 = pneg %p134
        $region54: #{tpu_custom_call.1} parent=51 // pred_check_branch
          %475 = sbr.rel (%p473) target = $region56
        $region55: #{tpu_custom_call.1} parent=51 // pred_region
          %s476 = sand.u32 %s119, 1
          %s477 = scalar_lea.sflag [#allocation4], %s476
          %s478 = sand.u32 %s119, 1
          %s479 = smul.addr %s478, 24
          %s480 = scalar_lea.vmem [#allocation8], %s479
          %482 = dma.done %s477, 384
        $region56: #{tpu_custom_call.1} parent=51 // pred_fallthru
          _
      $region52: #{tpu_custom_call.1} parent=5 // pred_fallthru
        _
    $region6: #{tpu_custom_call.1} parent=1 // loop_footer
      %s20 = sadd.s32 1, %s16
    $region7: #{tpu_custom_call.1} parent=1 // loop_footer_branch
      %15 = sbr.rel target = $region3
    $region8: #{tpu_custom_call.1} parent=1 // loop_exit
      _
    %483 = vsyncpa [#allocation3], 1
    %s484 = scalar_lea.sflag [#allocation3], 1
    %485 = vsyncpa %s484, 1
    %486 = vsyncpa [#allocation6], 1
    %487 = vsyncpa [#allocation4], 1
    %s488 = scalar_lea.sflag [#allocation4], 1
    %489 = vsyncpa %s488, 1

</llo_original>
